<compile_context>
chip_gen: v7x
topology: tpu7x:2x2x1
jax: 0.10.0
libtpu: 0.0.40
codegen_flags: <defaults>
</compile_context>

<pallas_src>
import functools
import math

import jax
import jax.numpy as jnp
from jax.experimental import pallas as pl
from jax.experimental.pallas import tpu as pltpu


def _layernorm(z, gamma, beta, eps):
    mu = jnp.mean(z, axis=-1, keepdims=True)
    var = jnp.mean((z - mu) ** 2, axis=-1, keepdims=True)
    return (z - mu) * jax.lax.rsqrt(var + eps) * gamma + beta


# --------------------------------------------------------------------------------------
# Pass 1: LayerNorm1 + fused QKV projection (tiled over batch and sequence).
# --------------------------------------------------------------------------------------
def qkv_kernel(x_ref, g1_ref, be1_ref, wqkv_ref, bqkv_ref,
               q_ref, k_ref, v_ref, *, eps):
    D = x_ref.shape[-1]
    xn = _layernorm(x_ref[0], g1_ref[...], be1_ref[...], eps)              # (TS, D) f32
    qkv = jnp.dot(xn.astype(jnp.bfloat16), wqkv_ref[...],
                  preferred_element_type=jnp.float32) + bqkv_ref[...]      # (TS, 3D) f32
    q_ref[0] = qkv[:, 0:D].astype(jnp.bfloat16)       # Q columns are pre-scaled by 1/sqrt(W)
    k_ref[0] = qkv[:, D:2 * D].astype(jnp.bfloat16)
    v_ref[0] = qkv[:, 2 * D:3 * D].astype(jnp.bfloat16)


# --------------------------------------------------------------------------------------
# Pass 2: flash-style attention over K/V tiles + output proj + residual + FFN.
# grid = (B, q tiles, kv tiles); kv axis is the (sequential) accumulation axis.
# --------------------------------------------------------------------------------------
def attn_ffn_kernel(x_ref, q_ref, k_ref, v_ref,
                    wo_ref, bo_ref, g2_ref, be2_ref,
                    w1_ref, b1_ref, w2_ref, b2_ref,
                    o_ref,
                    m_s, l_s, acc_s, ctx_s,
                    *, num_heads, eps, approximate_gelu):
    kv = pl.program_id(2)
    D = q_ref.shape[-1]
    W = D // num_heads

    @pl.when(kv == 0)
    def _():
        m_s[...] = jnp.full(m_s.shape, -jnp.inf, jnp.float32)
        l_s[...] = jnp.zeros(l_s.shape, jnp.float32)
        acc_s[...] = jnp.zeros(acc_s.shape, jnp.float32)

    q = q_ref[0]          # (TQ, D) bf16 (scale already folded into the QKV weights)
    k = k_ref[0]          # (TK, D) bf16
    v = v_ref[0]          # (TK, D) bf16

    # Per-head online softmax.  Heads are lane slices -> no (S,H,W)<->(H,S,W) transposes.
    # TODO(synk): switch to lax.fori_loop(..., unroll=2..4) for very large num_heads.
    for h in range(num_heads):
        lo = h * W
        qh = q[:, lo:lo + W]
        kh = k[:, lo:lo + W]
        vh = v[:, lo:lo + W]
        s = jax.lax.dot_general(qh, kh, (((1,), (1,)), ((), ())),
                                preferred_element_type=jnp.float32)        # (TQ, TK) f32
        m_prev = m_s[h]                                                    # (TQ, 1)
        m_new = jnp.maximum(m_prev, jnp.max(s, axis=-1, keepdims=True))
        alpha = jnp.exp(m_prev - m_new)
        p = jnp.exp(s - m_new)
        l_s[h] = alpha * l_s[h] + jnp.sum(p, axis=-1, keepdims=True)
        acc_s[:, lo:lo + W] = alpha * acc_s[:, lo:lo + W] + jnp.dot(
            p.astype(jnp.bfloat16), vh, preferred_element_type=jnp.float32)
        m_s[h] = m_new

    @pl.when(kv == pl.num_programs(2) - 1)
    def _():
        # Normalize each head straight into the bf16 context scratch (bounded live
        # ranges, no per-head concat / relayout).
        for h in range(num_heads):
            lo = h * W
            inv_l = pl.reciprocal(l_s[h], approx=True)
            ctx_s[:, lo:lo + W] = (acc_s[:, lo:lo + W] * inv_l).astype(jnp.bfloat16)

        attn = jnp.dot(ctx_s[...], wo_ref[...],
                       preferred_element_type=jnp.float32) + bo_ref[...]
        # Dropout = identity (eval mode).
        x1 = x_ref[0] + attn                                               # residual 1

        xn2 = _layernorm(x1, g2_ref[...], be2_ref[...], eps)
        hf = jnp.dot(xn2.astype(jnp.bfloat16), w1_ref[...],
                     preferred_element_type=jnp.float32) + b1_ref[...]
        hf = jax.nn.gelu(hf, approximate=approximate_gelu)   # False == PyTorch F.gelu default
        hf = jnp.dot(hf.astype(jnp.bfloat16), w2_ref[...],
                     preferred_element_type=jnp.float32) + b2_ref[...]
        o_ref[0] = (x1 + hf).astype(o_ref.dtype)                           # residual 2


# --------------------------------------------------------------------------------------
# Wrapper helpers.
# --------------------------------------------------------------------------------------
def _pick_tile(n, max_tile):
    for cand in (512, 256, 128, 64, 32, 16, 8):
        if cand <= max_tile and n % cand == 0:
            return cand
    return n


def _vmem_capacity_bytes():
    try:
        info = pltpu.get_tpu_info()
        for attr in ("vmem_capacity_bytes", "vmem_bytes", "vmem_size_bytes"):
            val = getattr(info, attr, None)
            if val:
                return int(val)
    except Exception:
        pass
    return 64 << 20   # conservative (v7x-sized) default


def _vmem_limit(est_bytes, cap_bytes):
    # Leave 1/8 of physical VMEM as headroom; cap at 100 MiB on 128 MiB parts, never
    # request less than 32 MiB.
    hard_cap = min((cap_bytes * 7) // 8, 100 << 20)
    return int(min(max(est_bytes, 32 << 20), hard_cap))


def prepare_block_params(params, *, num_heads):
    """One-time parameter preparation (hoisted out of the per-call forward).

    Builds the fused (D, 3D) bf16 QKV weight with 1/sqrt(head_dim) folded into the Q
    columns, plus bf16 copies of the other matmul weights.  LN params / biases stay f32.
    """
    D = params["wq"].shape[0]
    W = D // num_heads
    scale = jnp.float32(1.0 / math.sqrt(W))
    wqkv = jnp.concatenate(
        [params["wq"] * scale, params["wk"], params["wv"]], axis=1).astype(jnp.bfloat16)
    bqkv = jnp.concatenate(
        [params["bq"] * scale, params["bk"], params["bv"]], axis=1).astype(jnp.float32)
    f32 = lambda a: jnp.asarray(a, jnp.float32)
    return {
        "wqkv": wqkv, "bqkv": bqkv,
        "wo": params["wo"].astype(jnp.bfloat16), "bo": f32(params["bo"]),
        "g1": f32(params["g1"]), "be1": f32(params["be1"]),
        "g2": f32(params["g2"]), "be2": f32(params["be2"]),
        "w1": params["w1"].astype(jnp.bfloat16), "b1": f32(params["b1"]),
        "w2": params["w2"].astype(jnp.bfloat16), "b2": f32(params["b2"]),
    }


def block_vanilla(x, prep, *, num_heads, eps, approximate_gelu=False):
    B, S, D = x.shape
    FF = prep["w1"].shape[1]
    assert D % num_heads == 0

    cap = _vmem_capacity_bytes()
    big_vmem = cap >= (96 << 20)            # v5e/v6e (128 MiB) vs v7x (64 MiB)
    max_tile = 512 if big_vmem else 256
    tq = _pick_tile(S, max_tile)
    tk = _pick_tile(S, max_tile)
    ts = tq
    nq, nk, ns = S // tq, S // tk, S // ts

    # ---------------- pass 1: LN1 + fused QKV ----------------
    rep2 = lambda shape: pl.BlockSpec(shape, lambda b, si: (0, 0))
    qkv_in_specs = [
        pl.BlockSpec((1, ts, D), lambda b, si: (b, si, 0)),          # x tile
        rep2((1, D)), rep2((1, D)),                                  # g1, be1
        rep2((D, 3 * D)), rep2((1, 3 * D)),                          # wqkv, bqkv
    ]
    qkv_out_specs = [pl.BlockSpec((1, ts, D), lambda b, si: (b, si, 0))] * 3
    qkv_out_shapes = [jax.ShapeDtypeStruct((B, S, D), jnp.bfloat16)] * 3

    est1 = (2 * ts * D * 4                       # x blocks (double-buffered)
            + 2 * (3 * D * D * 2 + 3 * D * 4)    # wqkv + bqkv
            + 6 * ts * D * 2                     # q/k/v output blocks
            + 2 * ts * 3 * D * 4                 # (TS, 3D) f32 intermediate
            + (4 << 20))
    cost1 = pl.CostEstimate(
        flops=int(6 * B * S * D * D),
        transcendentals=int(B * S),
        bytes_accessed=int(B * S * D * 4 + 3 * B * S * D * 2 + 3 * D * D * 2))

    q, k, v = pl.pallas_call(
        functools.partial(qkv_kernel, eps=eps),
        out_shape=qkv_out_shapes,
        grid_spec=pltpu.PrefetchScalarGridSpec(
            num_scalar_prefetch=0, grid=(B, ns),
            in_specs=qkv_in_specs, out_specs=qkv_out_specs),
        compiler_params=pltpu.CompilerParams(
            dimension_semantics=("parallel", "parallel"),
            vmem_limit_bytes=_vmem_limit(est1, cap)),
        cost_estimate=cost1,
    )(x, prep["g1"], prep["be1"], prep["wqkv"], prep["bqkv"])

    # ---------------- pass 2: flash attention + residual + FFN ----------------
    rep3 = lambda shape: pl.BlockSpec(shape, lambda b, qi, ki: (0, 0))
    in_specs = [
        pl.BlockSpec((1, tq, D), lambda b, qi, ki: (b, qi, 0)),      # x residual tile
        pl.BlockSpec((1, tq, D), lambda b, qi, ki: (b, qi, 0)),      # q tile
        pl.BlockSpec((1, tk, D), lambda b, qi, ki: (b, ki, 0)),      # k tile
        pl.BlockSpec((1, tk, D), lambda b, qi, ki: (b, ki, 0)),      # v tile
        rep3((D, D)), rep3((1, D)),                                  # wo, bo
        rep3((1, D)), rep3((1, D)),                                  # g2, be2
        rep3((D, FF)), rep3((1, FF)),                                # w1, b1
        rep3((FF, D)), rep3((1, D)),                                 # w2, b2
    ]
    out_spec = pl.BlockSpec((1, tq, D), lambda b, qi, ki: (b, qi, 0))

    scratch_shapes = [
        pltpu.VMEM((num_heads, tq, 1), jnp.float32),   # running max (per head)
        pltpu.VMEM((num_heads, tq, 1), jnp.float32),   # running sum (per head)
        pltpu.VMEM((tq, D), jnp.float32),              # unnormalized context acc
        pltpu.VMEM((tq, D), jnp.bfloat16),             # normalized bf16 context
    ]

    w_bytes = 2 * (D * D + D * FF + FF * D) + 4 * (3 * D + FF)
    est2 = (2 * tq * D * 4 + 2 * tq * D * 2            # x, q blocks
            + 4 * tk * D * 2                           # k, v blocks
            + 2 * tq * D * 4                           # output block
            + 2 * w_bytes                              # weights (double-buffered)
            + 2 * num_heads * tq * 128 * 4             # m, l scratch (lane-padded)
            + tq * D * 4 + tq * D * 2                  # acc + ctx scratch
            + 2 * tq * tk * 4 + 2 * tq * FF * 4        # live scores / FFN hidden
            + (8 << 20))
    cost2 = pl.CostEstimate(
        flops=int(B * S * (4 * S * D + 2 * D * D + 4 * D * FF)),
        transcendentals=int(B * num_heads * S * S + B * S * FF + B * S),
        bytes_accessed=int(2 * B * S * D * 4 + B * S * D * 2
                           + 2 * B * S * D * 2 * nq
                           + 2 * (D * D + D * FF + FF * D)))

    return pl.pallas_call(
        functools.partial(attn_ffn_kernel, num_heads=num_heads, eps=eps,
                          approximate_gelu=approximate_gelu),
        out_shape=jax.ShapeDtypeStruct((B, S, D), jnp.float32),
        grid_spec=pltpu.PrefetchScalarGridSpec(
            num_scalar_prefetch=0, grid=(B, nq, nk),
            in_specs=in_specs, out_specs=out_spec,
            scratch_shapes=scratch_shapes),
        compiler_params=pltpu.CompilerParams(
            dimension_semantics=("parallel", "parallel", "arbitrary"),
            vmem_limit_bytes=_vmem_limit(est2, cap)),
        cost_estimate=cost2,
    )(x, q, k, v,
      prep["wo"], prep["bo"], prep["g2"], prep["be2"],
      prep["w1"], prep["b1"], prep["w2"], prep["b2"])


def block_vanilla_reference(x, params, *, num_heads, eps):
    """Pure-JAX f32 reference matching the PyTorch forward (eval mode)."""
    B, S, D = x.shape
    W = D // num_heads

    def ln(z, g, b):
        mu = jnp.mean(z, axis=-1, keepdims=True)
        var = jnp.mean((z - mu) ** 2, axis=-1, keepdims=True)
        return (z - mu) / jnp.sqrt(var + eps) * g + b

    xn = ln(x, params["g1"][0], params["be1"][0])
    q = xn @ params["wq"] + params["bq"][0]
    k = xn @ params["wk"] + params["bk"][0]
    v = xn @ params["wv"] + params["bv"][0]
    qh = q.reshape(B, S, num_heads, W).transpose(0, 2, 1, 3)
    kh = k.reshape(B, S, num_heads, W).transpose(0, 2, 1, 3)
    vh = v.reshape(B, S, num_heads, W).transpose(0, 2, 1, 3)
    scores = jnp.einsum("bhqw,bhkw->bhqk", qh, kh) / jnp.sqrt(jnp.float32(W))
    p = jax.nn.softmax(scores, axis=-1)
    ctx = jnp.einsum("bhqk,bhkw->bhqw", p, vh).transpose(0, 2, 1, 3).reshape(B, S, D)
    x1 = x + ctx @ params["wo"] + params["bo"][0]
    xn2 = ln(x1, params["g2"][0], params["be2"][0])
    hf = jax.nn.gelu(xn2 @ params["w1"] + params["b1"][0], approximate=False)
    hf = hf @ params["w2"] + params["b2"][0]
    return x1 + hf


if __name__ == "__main__":
    B, S, D = 2, 8, 32
    NUM_HEADS = 4
    FF = 64
    EPS = 1e-6

    key = jax.random.PRNGKey(0)
    ks = jax.random.split(key, 17)

    def w(k, shape, scale=0.1):
        return (scale * jax.random.normal(k, shape)).astype(jnp.float32)

    params = {
        "wq": w(ks[0], (D, D)), "bq": w(ks[1], (1, D)),
        "wk": w(ks[2], (D, D)), "bk": w(ks[3], (1, D)),
        "wv": w(ks[4], (D, D)), "bv": w(ks[5], (1, D)),
        "wo": w(ks[6], (D, D)), "bo": w(ks[7], (1, D)),
        "g1": (1.0 + w(ks[8], (1, D))).astype(jnp.float32),
        "be1": w(ks[9], (1, D)),
        "g2": (1.0 + w(ks[10], (1, D))).astype(jnp.float32),
        "be2": w(ks[11], (1, D)),
        "w1": w(ks[12], (D, FF)), "b1": w(ks[13], (1, FF)),
        "w2": w(ks[14], (FF, D)), "b2": w(ks[15], (1, D)),
    }

    x = jax.random.normal(ks[16], (B, S, D), dtype=jnp.float32)

    prep = prepare_block_params(params, num_heads=NUM_HEADS)   # one-time weight prep
    out = block_vanilla(x, prep, num_heads=NUM_HEADS, eps=EPS)
    out = jax.block_until_ready(out)

    ref = block_vanilla_reference(x, params, num_heads=NUM_HEADS, eps=EPS)
    assert out.shape == (B, S, D)
    # bf16 MXU inputs + approx reciprocal -> looser tolerance than a pure-f32 path.
    max_err = float(jnp.max(jnp.abs(out - ref)))
    assert jnp.allclose(out, ref, rtol=5e-2, atol=5e-2), (
        f"mismatch vs JAX reference (max abs err {max_err})")

    print("KERNEL_OK")
</pallas_src>

<mosaic_0001>
module attributes {stable_mosaic.version = 11 : i64} {
  func.func @qkv_kernel(%arg0: i32, %arg1: i32, %arg2: memref<1x8x32xf32, #tpu.memory_space<vmem>>, %arg3: memref<1x32xf32, #tpu.memory_space<vmem>>, %arg4: memref<1x32xf32, #tpu.memory_space<vmem>>, %arg5: memref<32x96xbf16, #tpu.memory_space<vmem>>, %arg6: memref<1x96xf32, #tpu.memory_space<vmem>>, %arg7: memref<1x8x32xbf16, #tpu.memory_space<vmem>>, %arg8: memref<1x8x32xbf16, #tpu.memory_space<vmem>>, %arg9: memref<1x8x32xbf16, #tpu.memory_space<vmem>>) attributes {dimension_semantics = [#tpu.dimension_semantics<parallel>, #tpu.dimension_semantics<parallel>], iteration_bounds = array<i64: 2, 1>, scalar_prefetch = 0 : i64, scratch_operands = 0 : i64, tpu.core_type = #tpu.core_type<tc>, window_params = [{transform_indices = @transform_0, window_bounds = array<i64: 1, 8, 32>}, {pipeline_mode = #tpu.pipeline_mode<synchronous>, transform_indices = @transform_1, window_bounds = array<i64: 1, 32>}, {pipeline_mode = #tpu.pipeline_mode<synchronous>, transform_indices = @transform_2, window_bounds = array<i64: 1, 32>}, {pipeline_mode = #tpu.pipeline_mode<synchronous>, transform_indices = @transform_3, window_bounds = array<i64: 32, 96>}, {pipeline_mode = #tpu.pipeline_mode<synchronous>, transform_indices = @transform_4, window_bounds = array<i64: 1, 96>}, {transform_indices = @transform_5, window_bounds = array<i64: 1, 8, 32>}, {transform_indices = @transform_6, window_bounds = array<i64: 1, 8, 32>}, {transform_indices = @transform_7, window_bounds = array<i64: 1, 8, 32>}]} {
    %c0 = arith.constant 0 : index
    %c0_0 = arith.constant 0 : index
    %c0_1 = arith.constant 0 : index
    %0 = vector.load %arg2[%c0, %c0_0, %c0_1] : memref<1x8x32xf32, #tpu.memory_space<vmem>>, vector<1x8x32xf32>
    %1 = vector.shape_cast %0 : vector<1x8x32xf32> to vector<8x32xf32>
    %c0_2 = arith.constant 0 : index
    %c0_3 = arith.constant 0 : index
    %2 = vector.load %arg3[%c0_2, %c0_3] : memref<1x32xf32, #tpu.memory_space<vmem>>, vector<1x32xf32>
    %c0_4 = arith.constant 0 : index
    %c0_5 = arith.constant 0 : index
    %3 = vector.load %arg4[%c0_4, %c0_5] : memref<1x32xf32, #tpu.memory_space<vmem>>, vector<1x32xf32>
    %cst = arith.constant dense<0.000000e+00> : vector<8xf32>
    %4 = vector.multi_reduction <add>, %1, %cst [1] : vector<8x32xf32> to vector<8xf32>
    %5 = vector.shape_cast %4 : vector<8xf32> to vector<8x1xf32>
    %cst_6 = arith.constant 3.200000e+01 : f32
    %6 = vector.broadcast %cst_6 : f32 to vector<8x1xf32>
    %7 = arith.divf %5, %6 : vector<8x1xf32>
    %8 = vector.broadcast %7 : vector<8x1xf32> to vector<8x32xf32>
    %9 = arith.subf %1, %8 : vector<8x32xf32>
    %10 = arith.mulf %9, %9 : vector<8x32xf32>
    %cst_7 = arith.constant dense<0.000000e+00> : vector<8xf32>
    %11 = vector.multi_reduction <add>, %10, %cst_7 [1] : vector<8x32xf32> to vector<8xf32>
    %12 = vector.shape_cast %11 : vector<8xf32> to vector<8x1xf32>
    %cst_8 = arith.constant 3.200000e+01 : f32
    %13 = vector.broadcast %cst_8 : f32 to vector<8x1xf32>
    %14 = arith.divf %12, %13 : vector<8x1xf32>
    %15 = vector.broadcast %7 : vector<8x1xf32> to vector<8x32xf32>
    %16 = arith.subf %1, %15 : vector<8x32xf32>
    %cst_9 = arith.constant 9.99999997E-7 : f32
    %17 = vector.broadcast %cst_9 : f32 to vector<8x1xf32>
    %18 = arith.addf %14, %17 : vector<8x1xf32>
    %19 = math.rsqrt %18 : vector<8x1xf32>
    %20 = vector.broadcast %19 : vector<8x1xf32> to vector<8x32xf32>
    %21 = arith.mulf %16, %20 : vector<8x32xf32>
    %22 = vector.broadcast %2 : vector<1x32xf32> to vector<8x32xf32>
    %23 = arith.mulf %21, %22 : vector<8x32xf32>
    %24 = vector.broadcast %3 : vector<1x32xf32> to vector<8x32xf32>
    %25 = arith.addf %23, %24 : vector<8x32xf32>
    %26 = arith.truncf %25 : vector<8x32xf32> to vector<8x32xbf16>
    %c0_10 = arith.constant 0 : index
    %c0_11 = arith.constant 0 : index
    %27 = vector.load %arg5[%c0_10, %c0_11] : memref<32x96xbf16, #tpu.memory_space<vmem>>, vector<32x96xbf16>
    %cst_12 = arith.constant dense<0.000000e+00> : vector<8x96xf32>
    %28 = tpu.matmul %26, %27, %cst_12 {dimension_numbers = #tpu.dot_dimension_numbers<[1], [0], [0], [1], [0, 0, 1, 1], [], []>} : vector<8x32xbf16>, vector<32x96xbf16>, vector<8x96xf32> -> vector<8x96xf32>
    %c0_13 = arith.constant 0 : index
    %c0_14 = arith.constant 0 : index
    %29 = vector.load %arg6[%c0_13, %c0_14] : memref<1x96xf32, #tpu.memory_space<vmem>>, vector<1x96xf32>
    %30 = vector.broadcast %29 : vector<1x96xf32> to vector<8x96xf32>
    %31 = arith.addf %28, %30 : vector<8x96xf32>
    %32 = vector.extract_strided_slice %31 {offsets = [0, 0], sizes = [8, 32], strides = [1, 1]} : vector<8x96xf32> to vector<8x32xf32>
    %33 = arith.truncf %32 : vector<8x32xf32> to vector<8x32xbf16>
    %c0_15 = arith.constant 0 : index
    %c0_16 = arith.constant 0 : index
    %c0_17 = arith.constant 0 : index
    %34 = vector.load %arg7[%c0_15, %c0_16, %c0_17] : memref<1x8x32xbf16, #tpu.memory_space<vmem>>, vector<1x8x32xbf16>
    %35 = vector.shape_cast %34 : vector<1x8x32xbf16> to vector<8x32xbf16>
    %36 = vector.shape_cast %33 : vector<8x32xbf16> to vector<1x8x32xbf16>
    tpu.vector_store %arg7[%c0_15, %c0_16, %c0_17], %36 {strides = array<i32>} : memref<1x8x32xbf16, #tpu.memory_space<vmem>>, vector<1x8x32xbf16>,
    %37 = vector.extract_strided_slice %31 {offsets = [0, 32], sizes = [8, 32], strides = [1, 1]} : vector<8x96xf32> to vector<8x32xf32>
    %38 = arith.truncf %37 : vector<8x32xf32> to vector<8x32xbf16>
    %c0_18 = arith.constant 0 : index
    %c0_19 = arith.constant 0 : index
    %c0_20 = arith.constant 0 : index
    %39 = vector.load %arg8[%c0_18, %c0_19, %c0_20] : memref<1x8x32xbf16, #tpu.memory_space<vmem>>, vector<1x8x32xbf16>
    %40 = vector.shape_cast %39 : vector<1x8x32xbf16> to vector<8x32xbf16>
    %41 = vector.shape_cast %38 : vector<8x32xbf16> to vector<1x8x32xbf16>
    tpu.vector_store %arg8[%c0_18, %c0_19, %c0_20], %41 {strides = array<i32>} : memref<1x8x32xbf16, #tpu.memory_space<vmem>>, vector<1x8x32xbf16>,
    %42 = vector.extract_strided_slice %31 {offsets = [0, 64], sizes = [8, 32], strides = [1, 1]} : vector<8x96xf32> to vector<8x32xf32>
    %43 = arith.truncf %42 : vector<8x32xf32> to vector<8x32xbf16>
    %c0_21 = arith.constant 0 : index
    %c0_22 = arith.constant 0 : index
    %c0_23 = arith.constant 0 : index
    %44 = vector.load %arg9[%c0_21, %c0_22, %c0_23] : memref<1x8x32xbf16, #tpu.memory_space<vmem>>, vector<1x8x32xbf16>
    %45 = vector.shape_cast %44 : vector<1x8x32xbf16> to vector<8x32xbf16>
    %46 = vector.shape_cast %43 : vector<8x32xbf16> to vector<1x8x32xbf16>
    tpu.vector_store %arg9[%c0_21, %c0_22, %c0_23], %46 {strides = array<i32>} : memref<1x8x32xbf16, #tpu.memory_space<vmem>>, vector<1x8x32xbf16>,
    return
  }
  func.func @transform_0(%arg0: i32, %arg1: i32) -> (i32, i32, i32) {
    %c0_i32 = arith.constant 0 : i32
    %c0_i32_0 = arith.constant 0 : i32
    return %arg0, %arg1, %c0_i32 : i32, i32, i32
  }
  func.func @transform_1(%arg0: i32, %arg1: i32) -> (i32, i32) {
    %c0_i32 = arith.constant 0 : i32
    %c0_i32_0 = arith.constant 0 : i32
    %c0_i32_1 = arith.constant 0 : i32
    return %c0_i32, %c0_i32_0 : i32, i32
  }
  func.func @transform_2(%arg0: i32, %arg1: i32) -> (i32, i32) {
    %c0_i32 = arith.constant 0 : i32
    %c0_i32_0 = arith.constant 0 : i32
    %c0_i32_1 = arith.constant 0 : i32
    return %c0_i32, %c0_i32_0 : i32, i32
  }
  func.func @transform_3(%arg0: i32, %arg1: i32) -> (i32, i32) {
    %c0_i32 = arith.constant 0 : i32
    %c0_i32_0 = arith.constant 0 : i32
    %c0_i32_1 = arith.constant 0 : i32
    return %c0_i32, %c0_i32_0 : i32, i32
  }
  func.func @transform_4(%arg0: i32, %arg1: i32) -> (i32, i32) {
    %c0_i32 = arith.constant 0 : i32
    %c0_i32_0 = arith.constant 0 : i32
    %c0_i32_1 = arith.constant 0 : i32
    return %c0_i32, %c0_i32_0 : i32, i32
  }
  func.func @transform_5(%arg0: i32, %arg1: i32) -> (i32, i32, i32) {
    %c0_i32 = arith.constant 0 : i32
    %c0_i32_0 = arith.constant 0 : i32
    return %arg0, %arg1, %c0_i32 : i32, i32, i32
  }
  func.func @transform_6(%arg0: i32, %arg1: i32) -> (i32, i32, i32) {
    %c0_i32 = arith.constant 0 : i32
    %c0_i32_0 = arith.constant 0 : i32
    return %arg0, %arg1, %c0_i32 : i32, i32, i32
  }
  func.func @transform_7(%arg0: i32, %arg1: i32) -> (i32, i32, i32) {
    %c0_i32 = arith.constant 0 : i32
    %c0_i32_0 = arith.constant 0 : i32
    return %arg0, %arg1, %c0_i32 : i32, i32, i32
  }
}

</mosaic_0001>

<llo_original>
// kernel: tpu_custom_call.1
$region0: #{tpu_custom_call.1}
  #allocation0 [shape = 'u32[]', space=smem, size = 0x4, offset = 0x4, fixed_abs, tag = 'smem constant byte address 0x4 - core index']
  #allocation1 [shape = 'u32[144,128]{1,0:T(1,128)}', space=vmem, size = 0x12000, scoped, tag = 'internal scratch']
  %s0 = inlined_call_operand.hbm [shape: f32[2,8,32], index: 0, kind: input, shape index: {}]
  %s1 = inlined_call_operand.vmem [shape: f32[1,32], index: 1, kind: input, shape index: {}]
  %s2 = inlined_call_operand.vmem [shape: f32[1,32], index: 2, kind: input, shape index: {}]
  %s3 = inlined_call_operand.hbm [shape: bf16[32,96], index: 3, kind: input, shape index: {}]
  %s4 = inlined_call_operand.vmem [shape: f32[1,96], index: 4, kind: input, shape index: {}]
  %s5 = inlined_call_operand.hbm [shape: bf16[2,8,32], index: 5, kind: output, shape index: {0}]
  %s6 = inlined_call_operand.hbm [shape: bf16[2,8,32], index: 6, kind: output, shape index: {1}]
  %s7 = inlined_call_operand.hbm [shape: bf16[2,8,32], index: 7, kind: output, shape index: {2}]
  %8 = xla_tuple %s5, %s6, %s7
  %s9 = sld [smem:[#allocation0]]
  $region77: #{tpu_custom_call.1} parent=0
    _
  %s11 = ssub.s32 1, %s9
  %s12 = scalar_select 0, %s11, %s9
  $region1: #{tpu_custom_call.1} parent=0
    #allocation2 [shape = 'u8[8192]{0}', space=vmem, size = 0x2000, scoped, tag = 'input window, operand 0']
    #allocation3 [shape = 's32[2]{0}', space=sflag, size = 0x8, scoped, tag = 'scoped memory for tpu_custom_call.1']
    #allocation4 [shape = 's32[2]{0}', space=sflag, size = 0x8, scoped, tag = 'scoped memory for tpu_custom_call.1']
    #allocation5 [shape = 'u8[8192]{0}', space=vmem, size = 0x2000, scoped, tag = 'input window, operand 3, single buffered']
    #allocation6 [shape = 's32[1]{0}', space=sflag, size = 0x4, scoped, tag = 'scoped memory for tpu_custom_call.1']
    #allocation7 [shape = 'u8[4096]{0}', space=vmem, size = 0x1000, scoped, tag = 'output window, operand 0']
    #allocation8 [shape = 'u8[4096]{0}', space=vmem, size = 0x1000, scoped, tag = 'output window, operand 1']
    #allocation9 [shape = 's32[2]{0}', space=sflag, size = 0x8, scoped, tag = 'scoped memory for tpu_custom_call.1']
    #allocation10 [shape = 'u8[4096]{0}', space=vmem, size = 0x1000, scoped, tag = 'output window, operand 2']
    %13 = vsyncpa [#allocation3], 0
    %s14 = scalar_lea.sflag [#allocation3], 1
    %15 = vsyncpa %s14, 0
    %16 = vsyncpa [#allocation6], 0
    %17 = vsyncpa [#allocation4], 0
    %s18 = scalar_lea.sflag [#allocation4], 1
    %19 = vsyncpa %s18, 0
    %20 = vsyncpa [#allocation9], 0
    %s21 = scalar_lea.sflag [#allocation9], 1
    %22 = vsyncpa %s21, 0
    loop: start=0, step=1, limit=4
    $region2: #{tpu_custom_call.1} parent=1 // loop_pre_header
      _
    $region3: #{tpu_custom_call.1} parent=1 // loop_header
      %s24 = sphi 0, %s28
      %p25 = scmp.ge.s32.totalorder %s24, 4
      %s31 = sphi 0, %s43
      %s32 = sphi 0, %s39
      %s33 = sphi 0, %s31
      %s34 = sphi 0, %s32
      %s35 = sphi 0, %s33
      %s36 = sphi 0, %s34
      %s48 = sphi 0, %s50
      %s51 = sphi 0, %s48
      %s52 = sphi 0, %s51
      %s68 = sphi 0, %s52
      %s72 = sphi 0, %s72
      %s74 = sphi 0, %s72
      %s75 = sphi 0, %s74
      %s89 = sphi 0, %s75
      %s93 = sphi 0, %s93
      %s95 = sphi 0, %s93
      %s96 = sphi 0, %s95
      %s110 = sphi 0, %s96
      %s114 = sphi 0, %s114
      %s116 = sphi 0, %s114
      %s117 = sphi 0, %s116
      %s131 = sphi 0, %s117
      %s135 = sphi 0, %s135
      %s137 = sphi 0, %s135
      %s138 = sphi 0, %s137
      %s152 = sphi 0, %s138
      %s160 = sphi 0, %s162
      %s163 = sphi 0, %s160
      %s164 = sphi 0, %s163
      %s180 = sphi 0, %s164
      %s188 = sphi 0, %s190
      %s191 = sphi 0, %s188
      %s192 = sphi 0, %s191
      %s208 = sphi 0, %s192
      %s216 = sphi 0, %s218
      %s219 = sphi 0, %s216
      %s220 = sphi 0, %s219
      %s236 = sphi 0, %s220
    $region4: #{tpu_custom_call.1} parent=1 // loop_header_branch
      %27 = sbr.rel (%p25) target = $region8
    $region5: #{tpu_custom_call.1} parent=1 // loop_body
      %s29 = ssub.s32 %s24, 1
      %s30 = ssub.s32 %s24, 2
      %s37 = sadd.s32 1, %s32
      %p38 = scmp.ge.s32.totalorder %s37, 1
      %s39 = scalar_select %p38, 0, %s37
      %s40 = sadd.s32 1, %s31
      %s41 = scalar_select %p38, %s40, %s31
      %p42 = scmp.ge.s32.totalorder %s41, 2
      %s43 = scalar_select %p42, 0, %s41
      %s44 = ssub.s32 %s31, %s43
      %s45 = ssub.s32 %s32, %s39
      %s46 = sor.u32 %s44, %s45
      %p47 = scmp.eq.s32.totalorder %s46, 0
      %s49 = sadd.s32 %s48, 1
      %s50 = scalar_select %p47, %s48, %s49
      %p53 = pneg %p47
      %p54 = scmp.eq.s32.totalorder %s24, 1
      %p55 = por %p53, %p54
      %p56 = scmp.ne.s32.totalorder %s48, %s51
      %p57 = scmp.eq.s32.totalorder %s24, 0
      %p58 = por %p56, %p57
      %p59 = scmp.ne.s32.totalorder %s48, %s51
      %p60 = scmp.eq.s32.totalorder %s29, 1
      %p61 = por %p59, %p60
      %p62 = scmp.ne.s32.totalorder %s51, %s52
      %p63 = scmp.eq.s32.totalorder %s29, 0
      %p64 = por %p62, %p63
      %p65 = scmp.ne.s32.totalorder %s51, %s52
      %p66 = scmp.eq.s32.totalorder %s30, 1
      %p67 = por %p65, %p66
      %p69 = scmp.ne.s32.totalorder %s52, %s68
      %p70 = scmp.eq.s32.totalorder %s30, 0
      %p71 = por %p69, %p70
      %s73 = sadd.s32 %s72, 1
      %p76 = scmp.eq.s32.totalorder %s24, 1
      %p77 = scmp.ne.s32.totalorder %s72, %s74
      %p78 = scmp.eq.s32.totalorder %s24, 0
      %p79 = por %p77, %p78
      %p80 = scmp.ne.s32.totalorder %s72, %s74
      %p81 = scmp.eq.s32.totalorder %s29, 1
      %p82 = por %p80, %p81
      %p83 = scmp.ne.s32.totalorder %s74, %s75
      %p84 = scmp.eq.s32.totalorder %s29, 0
      %p85 = por %p83, %p84
      %p86 = scmp.ne.s32.totalorder %s74, %s75
      %p87 = scmp.eq.s32.totalorder %s30, 1
      %p88 = por %p86, %p87
      %p90 = scmp.ne.s32.totalorder %s75, %s89
      %p91 = scmp.eq.s32.totalorder %s30, 0
      %p92 = por %p90, %p91
      %s94 = sadd.s32 %s93, 1
      %p97 = scmp.eq.s32.totalorder %s24, 1
      %p98 = scmp.ne.s32.totalorder %s93, %s95
      %p99 = scmp.eq.s32.totalorder %s24, 0
      %p100 = por %p98, %p99
      %p101 = scmp.ne.s32.totalorder %s93, %s95
      %p102 = scmp.eq.s32.totalorder %s29, 1
      %p103 = por %p101, %p102
      %p104 = scmp.ne.s32.totalorder %s95, %s96
      %p105 = scmp.eq.s32.totalorder %s29, 0
      %p106 = por %p104, %p105
      %p107 = scmp.ne.s32.totalorder %s95, %s96
      %p108 = scmp.eq.s32.totalorder %s30, 1
      %p109 = por %p107, %p108
      %p111 = scmp.ne.s32.totalorder %s96, %s110
      %p112 = scmp.eq.s32.totalorder %s30, 0
      %p113 = por %p111, %p112
      %s115 = sadd.s32 %s114, 1
      %p118 = scmp.eq.s32.totalorder %s24, 1
      %p119 = scmp.ne.s32.totalorder %s114, %s116
      %p120 = scmp.eq.s32.totalorder %s24, 0
      %p121 = por %p119, %p120
      %p122 = scmp.ne.s32.totalorder %s114, %s116
      %p123 = scmp.eq.s32.totalorder %s29, 1
      %p124 = por %p122, %p123
      %p125 = scmp.ne.s32.totalorder %s116, %s117
      %p126 = scmp.eq.s32.totalorder %s29, 0
      %p127 = por %p125, %p126
      %p128 = scmp.ne.s32.totalorder %s116, %s117
      %p129 = scmp.eq.s32.totalorder %s30, 1
      %p130 = por %p128, %p129
      %p132 = scmp.ne.s32.totalorder %s117, %s131
      %p133 = scmp.eq.s32.totalorder %s30, 0
      %p134 = por %p132, %p133
      %s136 = sadd.s32 %s135, 1
      %p139 = scmp.eq.s32.totalorder %s24, 1
      %p140 = scmp.ne.s32.totalorder %s135, %s137
      %p141 = scmp.eq.s32.totalorder %s24, 0
      %p142 = por %p140, %p141
      %p143 = scmp.ne.s32.totalorder %s135, %s137
      %p144 = scmp.eq.s32.totalorder %s29, 1
      %p145 = por %p143, %p144
      %p146 = scmp.ne.s32.totalorder %s137, %s138
      %p147 = scmp.eq.s32.totalorder %s29, 0
      %p148 = por %p146, %p147
      %p149 = scmp.ne.s32.totalorder %s137, %s138
      %p150 = scmp.eq.s32.totalorder %s30, 1
      %p151 = por %p149, %p150
      %p153 = scmp.ne.s32.totalorder %s138, %s152
      %p154 = scmp.eq.s32.totalorder %s30, 0
      %p155 = por %p153, %p154
      %s156 = ssub.s32 %s31, %s43
      %s157 = ssub.s32 %s32, %s39
      %s158 = sor.u32 %s156, %s157
      %p159 = scmp.eq.s32.totalorder %s158, 0
      %s161 = sadd.s32 %s160, 1
      %s162 = scalar_select %p159, %s160, %s161
      %p165 = pneg %p159
      %p166 = scmp.eq.s32.totalorder %s24, 1
      %p167 = por %p165, %p166
      %p168 = scmp.ne.s32.totalorder %s160, %s163
      %p169 = scmp.eq.s32.totalorder %s24, 0
      %p170 = por %p168, %p169
      %p171 = scmp.ne.s32.totalorder %s160, %s163
      %p172 = scmp.eq.s32.totalorder %s29, 1
      %p173 = por %p171, %p172
      %p174 = scmp.ne.s32.totalorder %s163, %s164
      %p175 = scmp.eq.s32.totalorder %s29, 0
      %p176 = por %p174, %p175
      %p177 = scmp.ne.s32.totalorder %s163, %s164
      %p178 = scmp.eq.s32.totalorder %s30, 1
      %p179 = por %p177, %p178
      %p181 = scmp.ne.s32.totalorder %s164, %s180
      %p182 = scmp.eq.s32.totalorder %s30, 0
      %p183 = por %p181, %p182
      %s184 = ssub.s32 %s31, %s43
      %s185 = ssub.s32 %s32, %s39
      %s186 = sor.u32 %s184, %s185
      %p187 = scmp.eq.s32.totalorder %s186, 0
      %s189 = sadd.s32 %s188, 1
      %s190 = scalar_select %p187, %s188, %s189
      %p193 = pneg %p187
      %p194 = scmp.eq.s32.totalorder %s24, 1
      %p195 = por %p193, %p194
      %p196 = scmp.ne.s32.totalorder %s188, %s191
      %p197 = scmp.eq.s32.totalorder %s24, 0
      %p198 = por %p196, %p197
      %p199 = scmp.ne.s32.totalorder %s188, %s191
      %p200 = scmp.eq.s32.totalorder %s29, 1
      %p201 = por %p199, %p200
      %p202 = scmp.ne.s32.totalorder %s191, %s192
      %p203 = scmp.eq.s32.totalorder %s29, 0
      %p204 = por %p202, %p203
      %p205 = scmp.ne.s32.totalorder %s191, %s192
      %p206 = scmp.eq.s32.totalorder %s30, 1
      %p207 = por %p205, %p206
      %p209 = scmp.ne.s32.totalorder %s192, %s208
      %p210 = scmp.eq.s32.totalorder %s30, 0
      %p211 = por %p209, %p210
      %s212 = ssub.s32 %s31, %s43
      %s213 = ssub.s32 %s32, %s39
      %s214 = sor.u32 %s212, %s213
      %p215 = scmp.eq.s32.totalorder %s214, 0
      %s217 = sadd.s32 %s216, 1
      %s218 = scalar_select %p215, %s216, %s217
      %p221 = pneg %p215
      %p222 = scmp.eq.s32.totalorder %s24, 1
      %p223 = por %p221, %p222
      %p224 = scmp.ne.s32.totalorder %s216, %s219
      %p225 = scmp.eq.s32.totalorder %s24, 0
      %p226 = por %p224, %p225
      %p227 = scmp.ne.s32.totalorder %s216, %s219
      %p228 = scmp.eq.s32.totalorder %s29, 1
      %p229 = por %p227, %p228
      %p230 = scmp.ne.s32.totalorder %s219, %s220
      %p231 = scmp.eq.s32.totalorder %s29, 0
      %p232 = por %p230, %p231
      %p233 = scmp.ne.s32.totalorder %s219, %s220
      %p234 = scmp.eq.s32.totalorder %s30, 1
      %p235 = por %p233, %p234
      %p237 = scmp.ne.s32.totalorder %s220, %s236
      %p238 = scmp.eq.s32.totalorder %s30, 0
      %p239 = por %p237, %p238
      %p240 = scmp.le.s32.totalorder 1, %s24
      %p241 = scmp.lt.s32.totalorder %s24, 3
      %p242 = pnand %p240, %p241
      %p243 = pneg %p242
      // Predicated region
      $region9: #{tpu_custom_call.1} parent=5 // pred_check
        _
      $region10: #{tpu_custom_call.1} parent=5 // pred_check_branch
        %245 = sbr.rel (%p242) target = $region12
      $region11: #{tpu_custom_call.1} parent=5 // pred_region
        %s246 = ssub.s32 %s24, 1
        // Predicated region
        $region13: #{tpu_custom_call.1} parent=11 // pred_check
          %p247 = pneg %p85
        $region14: #{tpu_custom_call.1} parent=11 // pred_check_branch
          %249 = sbr.rel (%p247) target = $region16
        $region15: #{tpu_custom_call.1} parent=11 // pred_region
          _
        $region16: #{tpu_custom_call.1} parent=11 // pred_fallthru
          _
        // Predicated region
        $region17: #{tpu_custom_call.1} parent=11 // pred_check
          %p250 = pneg %p106
        $region18: #{tpu_custom_call.1} parent=11 // pred_check_branch
          %252 = sbr.rel (%p250) target = $region20
        $region19: #{tpu_custom_call.1} parent=11 // pred_region
          _
        $region20: #{tpu_custom_call.1} parent=11 // pred_fallthru
          _
        // Predicated region
        $region21: #{tpu_custom_call.1} parent=11 // pred_check
          %p253 = pneg %p127
        $region22: #{tpu_custom_call.1} parent=11 // pred_check_branch
          %255 = sbr.rel (%p253) target = $region24
        $region23: #{tpu_custom_call.1} parent=11 // pred_region
          %s257 = ssub.s32 256, 256
          %258 = vsyncadd [#allocation6], %s257
          %s259 = sshll.u32 [#allocation5], 4
          %s260 = int_to_ptr.vmem [resolvable:$true] %s259
          %265 = dma.hbm_to_vmem [thread:$0]  %s3, 256, %s260, [#allocation6], 64, 64, 4
        $region24: #{tpu_custom_call.1} parent=11 // pred_fallthru
          _
        // Predicated region
        $region25: #{tpu_custom_call.1} parent=11 // pred_check
          %p266 = pneg %p148
        $region26: #{tpu_custom_call.1} parent=11 // pred_check_branch
          %268 = sbr.rel (%p266) target = $region28
        $region27: #{tpu_custom_call.1} parent=11 // pred_region
          _
        $region28: #{tpu_custom_call.1} parent=11 // pred_fallthru
          _
      $region12: #{tpu_custom_call.1} parent=5 // pred_fallthru
        _
      %p269 = scmp.lt.s32.totalorder %s24, 2
      // Predicated region
      $region29: #{tpu_custom_call.1} parent=5 // pred_check
        %p270 = pneg %p269
      $region30: #{tpu_custom_call.1} parent=5 // pred_check_branch
        %272 = sbr.rel (%p270) target = $region32
      $region31: #{tpu_custom_call.1} parent=5 // pred_region
        // Predicated region
        $region33: #{tpu_custom_call.1} parent=31 // pred_check
          %p273 = pneg %p58
        $region34: #{tpu_custom_call.1} parent=31 // pred_check_branch
          %275 = sbr.rel (%p273) target = $region36
        $region35: #{tpu_custom_call.1} parent=31 // pred_region
          %s276 = sand.u32 %s48, 1
          %s277 = scalar_lea.sflag [#allocation3], %s276
          %s278 = sand.u32 %s48, 1
          %s279 = smul.addr %s278, 8
          %s280 = scalar_lea.vmem [#allocation2], %s279
          %s282 = ssub.s32 128, 128
          %283 = vsyncadd %s277, %s282
          %s284 = sadd.s32 %s32, %s31
          %s285 = smul.addr %s284, 128
          %s286 = scalar_lea.hbm %s0, %s285
          %s288 = sshll.u32 %s280, 4
          %s289 = int_to_ptr.vmem [resolvable:$true] %s288
          %291 = dma.hbm_to_vmem [thread:$0]  %s286, 128, %s289, %s277
        $region36: #{tpu_custom_call.1} parent=31 // pred_fallthru
          _
      $region32: #{tpu_custom_call.1} parent=5 // pred_fallthru
        _
      %p292 = scmp.le.s32.totalorder 1, %s24
      %p293 = scmp.lt.s32.totalorder %s24, 3
      %p294 = pnand %p292, %p293
      %p295 = pneg %p294
      // Predicated region
      $region37: #{tpu_custom_call.1} parent=5 // pred_check
        _
      $region38: #{tpu_custom_call.1} parent=5 // pred_check_branch
        %297 = sbr.rel (%p294) target = $region40
      $region39: #{tpu_custom_call.1} parent=5 // pred_region
        %s298 = ssub.s32 %s24, 1
        %s299 = sand.u32 %s51, 1
        %s300 = scalar_lea.sflag [#allocation3], %s299
        %s301 = sand.u32 %s51, 1
        %s302 = smul.addr %s301, 8
        %s303 = scalar_lea.vmem [#allocation2], %s302
        // Predicated region
        $region41: #{tpu_custom_call.1} parent=39 // pred_check
          %p304 = pneg %p64
        $region42: #{tpu_custom_call.1} parent=39 // pred_check_branch
          %306 = sbr.rel (%p304) target = $region44
        $region43: #{tpu_custom_call.1} parent=39 // pred_region
          %307 = dma.done %s300, 128
        $region44: #{tpu_custom_call.1} parent=39 // pred_fallthru
          _
        // Predicated region
        $region45: #{tpu_custom_call.1} parent=39 // pred_check
          %p308 = pneg %p127
        $region46: #{tpu_custom_call.1} parent=39 // pred_check_branch
          %310 = sbr.rel (%p308) target = $region48
        $region47: #{tpu_custom_call.1} parent=39 // pred_region
          %311 = dma.done [#allocation6], 256
        $region48: #{tpu_custom_call.1} parent=39 // pred_fallthru
          _
        %s312 = sand.u32 %s51, 1
        %s313 = scalar_lea.sflag [#allocation3], %s312
        %s314 = sand.u32 %s51, 1
        %s315 = smul.addr %s314, 8
        %s316 = scalar_lea.vmem [#allocation2], %s315
        %p317 = pneg %p64
        %p318 = pneg %p61
        %p319 = pneg %p85
        %p320 = pneg %p82
        %p321 = pneg %p106
        %p322 = pneg %p103
        %p323 = pneg %p127
        %p324 = pneg %p124
        %p325 = pneg %p148
        %p326 = pneg %p145
        %p327 = pneg %p176
        %p328 = pneg %p173
        %s329 = sand.u32 %s163, 1
        %s330 = scalar_lea.sflag [#allocation4], %s329
        %s331 = sand.u32 %s163, 1
        %s332 = smul.addr %s331, 4
        %s333 = scalar_lea.vmem [#allocation7], %s332
        %p334 = pneg %p204
        %p335 = pneg %p201
        %s336 = sand.u32 %s29, 1
        %s337 = scalar_lea.sflag [#allocation9], %s336
        %s338 = sand.u32 %s191, 1
        %s339 = smul.addr %s338, 4
        %s340 = scalar_lea.vmem [#allocation8], %s339
        %p341 = pneg %p232
        %p342 = pneg %p229
        %s343 = sand.u32 %s29, 1
        %s344 = scalar_lea.sflag [#allocation9], %s343
        %s345 = sand.u32 %s219, 1
        %s346 = smul.addr %s345, 4
        %s347 = scalar_lea.vmem [#allocation10], %s346
        %v349 = vld [vmem:[%s303] sm:$0xff]
        %v350 = vld [vmem:[%s1] sm:$0x1]
        %v351 = vld [vmem:[%s2] sm:$0x1]
        %vm352 = vcmask 261120
        %v353 = vsel %vm352, %v349, 0.0
        %354 = vadd.xlane.f32.xlu0 %v353
        %v355 = vpop.xlane.xlu0 %354
        %v356 = vrcp.pop 32.0
        %v357 = vmul.f32 %v355, %v356
        %v358 = vsub.f32 %v349, %v357
        %v359 = vmul.f32 %v358, %v358
        %v360 = vsel %vm352, %v359, 0.0
        %361 = vadd.xlane.f32.xlu0 %v360
        %v362 = vpop.xlane.xlu0 %361
        %v363 = vmul.f32 %v362, %v356
        %v364 = vadd.f32 %v363, 1e-06
        %v365 = vrsqrt.pop %v364
        %v366 = vmul.f32 %v358, %v365
        %v368 = vlaneseq
        %v369 = vshrl.u32 %v368, 7
        %v370 = vsub.s32 0, %v369
        %v371 = vrot.slane %v350, %v370
        %v373 = vmul.f32 %v366, %v371
        %v375 = vlaneseq
        %v376 = vshrl.u32 %v375, 7
        %v377 = vsub.s32 0, %v376
        %v378 = vrot.slane %v351, %v377
        %v380 = vadd.f32 %v373, %v378
        %v381 = vpack.c.bf16 %v380, %v380
        %v382 = vld [vmem:[#allocation5] sm:$0xf]
        %v383 = vld [vmem:[#allocation5 + $0x4] sm:$0xf]
        %v384 = vld [vmem:[#allocation5 + $0x8] sm:$0xf]
        %v385 = vld [vmem:[#allocation5 + $0xc] sm:$0xf]
        %v386 = vld [vmem:[%s4] sm:$0x1]
        %v388 = vlaneseq
        %v389 = vshrl.u32 %v388, 7
        %v390 = vsub.s32 0, %v389
        %v391 = vrot.slane %v386, %v390
        %v397 = vunpack.c.l.b16 %v382
        %v398 = vunpack.c.l.b16 %v383
        %v399 = vunpack.c.l.b16 %v384
        %v400 = vunpack.c.l.b16 %v385
        %v401 = vpack.c.b16 %v398, %v397
        %v402 = vpack.c.b16 %v400, %v399
        %v406 = vsel %vm352, %v381, 0
        %408 = vmatprep.subr.bf16.mxu0 0
        %409 = vmatpush1.bf16.msra.mxu0 %v401
        %410 = vmatprep.subr.bf16.mxu0 0
        %411 = vmatpush1.bf16.msra.mxu0 %v402
        %412 = vmatprep.subr.bf16.mxu0 0
        %413 = vmatpush1.bf16.msra.mxu0 0
        %414 = vmatprep.subr.bf16.mxu0 0
        %415 = vmatpush1.bf16.msra.mxu0 0
        %416 = vmatprep.subr.bf16.mxu0 0
        %417 = vmatpush1.bf16.msra.mxu0 0
        %418 = vmatprep.subr.bf16.mxu0 0
        %419 = vmatpush1.bf16.msra.mxu0 0
        %420 = vmatprep.subr.bf16.mxu0 0
        %421 = vmatpush1.bf16.msra.mxu0 0
        %422 = vmatprep.subr.bf16.mxu0 0
        %423 = vmatpush1.bf16.msra.mxu0 0
        %424 = vmatprep.subr.bf16.mxu0 0
        %425 = vmatpush1.bf16.msra.mxu0 0
        %426 = vmatprep.subr.bf16.mxu0 0
        %427 = vmatpush1.bf16.msra.mxu0 0
        %428 = vmatprep.subr.bf16.mxu0 0
        %429 = vmatpush1.bf16.msra.mxu0 0
        %430 = vmatprep.subr.bf16.mxu0 0
        %431 = vmatpush1.bf16.msra.mxu0 0
        %432 = vmatprep.subr.bf16.mxu0 0
        %433 = vmatpush1.bf16.msra.mxu0 0
        %434 = vmatprep.subr.bf16.mxu0 0
        %435 = vmatpush1.bf16.msra.mxu0 0
        %436 = vmatprep.subr.bf16.mxu0 0
        %437 = vmatpush1.bf16.msra.mxu0 0
        %438 = vmatprep.subr.bf16.mxu0 0
        %439 = vmatpush1.bf16.msra.mxu0 0
        %440 = vmatprep.mubr.bf16.mxu0 0
        %441 = vmatmul.mubr.bf16.gmra.mrb[0].mxu0 %v406
        %v442 = vpop.f32.mrb[0].mxu0
        %v443 = vadd.f32 %v391, %v442
        %v444 = vpop.f32.mrb[0].mxu0
        %v445 = vpop.f32.mrb[0].mxu0
        %v446 = vpop.f32.mrb[0].mxu0
        %447 = vdwg.mxu0
        %v448 = vpack.c.bf16 %v443, %v443
        %vm449 = vcmask 257024
        %450 = vst.msk [vmem:[%s333] sm:$0xf] %vm449, %v448
        %v452 = vunpack.c.l.b16 %v448
        %v453 = vpack.c.b16 %v452, %v452
        %454 = vrot.lane.b32.xlu0 %v453, 96
        %v455 = vpop.permute.xlu0 %454
        %457 = vst.msk [vmem:[%s340] sm:$0xf] %vm449, %v455
        %458 = vrot.lane.b32.xlu0 %v453, 64
        %v459 = vpop.permute.xlu0 %458
        %461 = vst.msk [vmem:[%s347] sm:$0xf] %vm449, %v459
        %s462 = sand.u32 %s163, 1
        %s463 = scalar_lea.sflag [#allocation4], %s462
        %s464 = sand.u32 %s163, 1
        %s465 = smul.addr %s464, 4
        %s466 = scalar_lea.vmem [#allocation7], %s465
        %s467 = sand.u32 %s29, 1
        %s468 = scalar_lea.sflag [#allocation9], %s467
        %s469 = sand.u32 %s191, 1
        %s470 = smul.addr %s469, 4
        %s471 = scalar_lea.vmem [#allocation8], %s470
        %s472 = sand.u32 %s29, 1
        %s473 = scalar_lea.sflag [#allocation9], %s472
        %s474 = sand.u32 %s219, 1
        %s475 = smul.addr %s474, 4
        %s476 = scalar_lea.vmem [#allocation10], %s475
        // Predicated region
        $region49: #{tpu_custom_call.1} parent=39 // pred_check
          %p477 = pneg %p173
        $region50: #{tpu_custom_call.1} parent=39 // pred_check_branch
          %479 = sbr.rel (%p477) target = $region52
        $region51: #{tpu_custom_call.1} parent=39 // pred_region
          %s481 = ssub.s32 64, 64
          %482 = vsyncadd %s463, %s481
          %s483 = sadd.s32 %s34, %s33
          %s484 = smul.addr %s483, 64
          %s485 = scalar_lea.hbm %s5, %s484
          %s487 = sshll.u32 %s466, 4
          %s488 = int_to_ptr.vmem [resolvable:$true] %s487
          %490 = dma.vmem_to_hbm [thread:$0]  %s488, 64, %s485, %s463
        $region52: #{tpu_custom_call.1} parent=39 // pred_fallthru
          _
        // Predicated region
        $region53: #{tpu_custom_call.1} parent=39 // pred_check
          %p491 = pneg %p201
        $region54: #{tpu_custom_call.1} parent=39 // pred_check_branch
          %493 = sbr.rel (%p491) target = $region56
        $region55: #{tpu_custom_call.1} parent=39 // pred_region
          %s495 = ssub.s32 64, 64
          %496 = vsyncadd %s468, %s495
          %s497 = sadd.s32 %s34, %s33
          %s498 = smul.addr %s497, 64
          %s499 = scalar_lea.hbm %s6, %s498
          %s501 = sshll.u32 %s471, 4
          %s502 = int_to_ptr.vmem [resolvable:$true] %s501
          %504 = dma.vmem_to_hbm [thread:$0]  %s502, 64, %s499, %s468
        $region56: #{tpu_custom_call.1} parent=39 // pred_fallthru
          _
        // Predicated region
        $region57: #{tpu_custom_call.1} parent=39 // pred_check
          %p505 = pneg %p229
        $region58: #{tpu_custom_call.1} parent=39 // pred_check_branch
          %507 = sbr.rel (%p505) target = $region60
        $region59: #{tpu_custom_call.1} parent=39 // pred_region
          %s509 = ssub.s32 64, 64
          %510 = vsyncadd %s473, %s509
          %s511 = sadd.s32 %s34, %s33
          %s512 = smul.addr %s511, 64
          %s513 = scalar_lea.hbm %s7, %s512
          %s515 = sshll.u32 %s476, 4
          %s516 = int_to_ptr.vmem [resolvable:$true] %s515
          %518 = dma.vmem_to_hbm [thread:$0]  %s516, 64, %s513, %s473
        $region60: #{tpu_custom_call.1} parent=39 // pred_fallthru
          _
      $region40: #{tpu_custom_call.1} parent=5 // pred_fallthru
        _
      %p519 = scmp.le.s32.totalorder 2, %s24
      // Predicated region
      $region61: #{tpu_custom_call.1} parent=5 // pred_check
        %p520 = pneg %p519
      $region62: #{tpu_custom_call.1} parent=5 // pred_check_branch
        %522 = sbr.rel (%p520) target = $region64
      $region63: #{tpu_custom_call.1} parent=5 // pred_region
        %s523 = ssub.s32 %s24, 2
        // Predicated region
        $region65: #{tpu_custom_call.1} parent=63 // pred_check
          %p524 = pneg %p179
        $region66: #{tpu_custom_call.1} parent=63 // pred_check_branch
          %526 = sbr.rel (%p524) target = $region68
        $region67: #{tpu_custom_call.1} parent=63 // pred_region
          %s527 = sand.u32 %s164, 1
          %s528 = scalar_lea.sflag [#allocation4], %s527
          %s529 = sand.u32 %s164, 1
          %s530 = smul.addr %s529, 4
          %s531 = scalar_lea.vmem [#allocation7], %s530
          %532 = dma.done %s528, 64
        $region68: #{tpu_custom_call.1} parent=63 // pred_fallthru
          _
        // Predicated region
        $region69: #{tpu_custom_call.1} parent=63 // pred_check
          %p533 = pneg %p207
        $region70: #{tpu_custom_call.1} parent=63 // pred_check_branch
          %535 = sbr.rel (%p533) target = $region72
        $region71: #{tpu_custom_call.1} parent=63 // pred_region
          %s536 = sand.u32 %s30, 1
          %s537 = scalar_lea.sflag [#allocation9], %s536
          %s538 = sand.u32 %s192, 1
          %s539 = smul.addr %s538, 4
          %s540 = scalar_lea.vmem [#allocation8], %s539
          %541 = dma.done %s537, 64
        $region72: #{tpu_custom_call.1} parent=63 // pred_fallthru
          _
        // Predicated region
        $region73: #{tpu_custom_call.1} parent=63 // pred_check
          %p542 = pneg %p235
        $region74: #{tpu_custom_call.1} parent=63 // pred_check_branch
          %544 = sbr.rel (%p542) target = $region76
        $region75: #{tpu_custom_call.1} parent=63 // pred_region
          %s545 = sand.u32 %s30, 1
          %s546 = scalar_lea.sflag [#allocation9], %s545
          %s547 = sand.u32 %s220, 1
          %s548 = smul.addr %s547, 4
          %s549 = scalar_lea.vmem [#allocation10], %s548
          %550 = dma.done %s546, 64
        $region76: #{tpu_custom_call.1} parent=63 // pred_fallthru
          _
      $region64: #{tpu_custom_call.1} parent=5 // pred_fallthru
        _
    $region6: #{tpu_custom_call.1} parent=1 // loop_footer
      %s28 = sadd.s32 1, %s24
    $region7: #{tpu_custom_call.1} parent=1 // loop_footer_branch
      %23 = sbr.rel target = $region3
    $region8: #{tpu_custom_call.1} parent=1 // loop_exit
      _
    %551 = vsyncpa [#allocation3], 1
    %s552 = scalar_lea.sflag [#allocation3], 1
    %553 = vsyncpa %s552, 1
    %554 = vsyncpa [#allocation6], 1
    %555 = vsyncpa [#allocation4], 1
    %s556 = scalar_lea.sflag [#allocation4], 1
    %557 = vsyncpa %s556, 1
    %558 = vsyncpa [#allocation9], 1
    %s559 = scalar_lea.sflag [#allocation9], 1
    %560 = vsyncpa %s559, 1

</llo_original>
